<compile_context>
chip_gen: v7x
topology: tpu7x:2x2x1
jax: 0.10.0
libtpu: 0.0.40
codegen_flags: <defaults>
</compile_context>

<pallas_src>
import functools

import jax
import jax.numpy as jnp
from jax.experimental import pallas as pl
from jax.experimental.pallas import tpu as pltpu

_EPS = 1e-5


def _tree_sum(xs):
    xs = list(xs)
    while len(xs) > 1:
        nxt = [xs[i] + xs[i + 1] for i in range(0, len(xs) - 1, 2)]
        if len(xs) % 2:
            nxt.append(xs[-1])
        xs = nxt
    return xs[0]


def _attention_kernel(x_ref, chmap_ref, cols_ref, sc_ref, wmask_ref, out_ref,
                      *, n, c, h, w):
    """x_ref:    (N*C, H*W) VMEM  -- free reshape view of NCHW input.
    chmap_ref:   (N*C, C)   VMEM  -- one-hot channel indicator (row i -> i % C).
    cols_ref:    (N*C, 3)   VMEM  -- per-row [bn1_gamma, bn1_beta, conv1_w].
    sc_ref:      (4,)       SMEM  -- [conv1_b, bn2_gamma, bn2_beta, conv3_b].
    wmask_ref:   (9, H*W)   VMEM  -- zero-padding masks with conv3 weights folded in.
    out_ref:     (N, H*W)   VMEM.
    """
    hw = h * w
    inv_cnt = 1.0 / float(n * hw)

    x = x_ref[...]                                               # (NC, HW)
    ch_map = chmap_ref[...]                                      # (NC, C)
    cols = cols_ref[...]                                         # (NC, 3)
    gamma_col = cols[:, 0:1]                                     # (NC, 1)
    beta_col = cols[:, 1:2]
    w1_col = cols[:, 2:3]

    # ---- BatchNorm2d(C), training-mode batch stats (two-pass variance) + ReLU
    row_sum = jnp.sum(x, axis=1, keepdims=True)                              # (NC, 1)
    ch_mean = jnp.sum(row_sum * ch_map, axis=0, keepdims=True) * inv_cnt     # (1, C)
    mean_col = jnp.sum(ch_map * ch_mean, axis=1, keepdims=True)              # (NC, 1)
    xc = x - mean_col
    row_sq = jnp.sum(xc * xc, axis=1, keepdims=True)                         # (NC, 1)
    ch_var = jnp.sum(row_sq * ch_map, axis=0, keepdims=True) * inv_cnt       # (1, C)
    var_col = jnp.sum(ch_map * ch_var, axis=1, keepdims=True)                # (NC, 1)
    scale_col = jax.lax.rsqrt(var_col + _EPS) * gamma_col
    x1 = jnp.maximum(xc * scale_col + beta_col, 0.0)                         # (NC, HW)

    # ---- 1x1 conv: C -> 1 (rows of one sample are contiguous; VPU tree add,
    # MXU stays idle on purpose at C=4) ----
    z = x1 * w1_col                                                          # (NC, HW)
    y_rows = []
    for i in range(n):
        zi = z[i * c:(i + 1) * c, :]                                         # (C, HW)
        y_rows.append(jnp.sum(zi, axis=0, keepdims=True))                    # (1, HW)
    y = (y_rows[0] if n == 1 else jnp.concatenate(y_rows, axis=0)) + sc_ref[0]   # (N, HW)

    # ---- BatchNorm2d(1) + ReLU ----
    mean2 = jnp.sum(y) * inv_cnt
    yc = y - mean2
    var2 = jnp.sum(yc * yc) * inv_cnt
    y2 = jnp.maximum(yc * (jax.lax.rsqrt(var2 + _EPS) * sc_ref[1]) + sc_ref[2], 0.0)

    # ---- 3x3 conv (1->1, padding=1): 9 lane-rolled taps, weights folded into masks
    wm = wmask_ref[...]                                                      # (9, HW)
    taps = []
    k = 0
    for di in (-1, 0, 1):
        for dj in (-1, 0, 1):
            d = di * w + dj                    # flattened offset of this tap
            shifted = y2 if d == 0 else pltpu.roll(y2, shift=(-d) % hw, axis=1)
            taps.append(shifted * wm[k:k + 1, :])
            k += 1
    out_ref[...] = _tree_sum(taps) + sc_ref[3]


def _border_masks(h, w):
    """(9, H*W) f32 masks implementing zero padding for the 9 conv taps."""
    pos = jnp.arange(h * w, dtype=jnp.int32)
    r = pos // w
    col = pos % w
    masks = []
    for di in (-1, 0, 1):
        for dj in (-1, 0, 1):
            ok = (r + di >= 0) & (r + di < h) & (col + dj >= 0) & (col + dj < w)
            masks.append(ok.astype(jnp.float32))
    return jnp.stack(masks, axis=0)            # (9, H*W)


@jax.jit
def attention_forward(x, params):
    """x: (N, C, H, W) f32 -> (N, 1, H, W) f32 (out_ch == 1)."""
    n, c, h, w = x.shape
    hw = h * w
    assert params["conv1_w"].shape[0] == 1, "module hard-codes BatchNorm2d(1): out_ch must be 1"

    # free view of contiguous NCHW: batch*channel on sublanes, H*W on lanes.
    x2 = x.reshape(n * c, hw).astype(jnp.float32)

    # per-row (N*C) parameter columns: [gamma, beta, conv1 weight] of row's channel.
    per_ch = jnp.stack([
        params["bn1_gamma"].reshape(c),
        params["bn1_beta"].reshape(c),
        params["conv1_w"].reshape(c),
    ], axis=1).astype(jnp.float32)                               # (C, 3)
    cols = jnp.tile(per_ch, (n, 1))                              # (N*C, 3)

    # one-hot channel indicator for in-kernel per-channel stat gather/scatter.
    row_ch = jnp.arange(n * c, dtype=jnp.int32) % c
    ch_map = (row_ch[:, None] == jnp.arange(c, dtype=jnp.int32)[None, :]
              ).astype(jnp.float32)                              # (N*C, C)

    scal = jnp.concatenate([
        params["conv1_b"].reshape(1),
        params["bn2_gamma"].reshape(1),
        params["bn2_beta"].reshape(1),
        params["conv3_b"].reshape(1),
    ]).astype(jnp.float32)                                       # (4,)

    # zero-padding masks with the 3x3 weights pre-folded in (lane-dense (9, HW)).
    wmasks = (_border_masks(h, w) *
              params["conv3_w"].reshape(9, 1).astype(jnp.float32))

    kernel = functools.partial(_attention_kernel, n=n, c=c, h=h, w=w)
    out = pl.pallas_call(
        kernel,
        out_shape=jax.ShapeDtypeStruct((n, hw), jnp.float32),
        in_specs=[
            pl.BlockSpec(memory_space=pltpu.MemorySpace.VMEM),   # x (N*C, HW)
            pl.BlockSpec(memory_space=pltpu.MemorySpace.VMEM),   # channel one-hot map
            pl.BlockSpec(memory_space=pltpu.MemorySpace.VMEM),   # per-row [gamma,beta,w1]
            pl.BlockSpec(memory_space=pltpu.MemorySpace.SMEM),   # packed scalars
            pl.BlockSpec(memory_space=pltpu.MemorySpace.VMEM),   # weight-folded masks
        ],
        out_specs=pl.BlockSpec(memory_space=pltpu.MemorySpace.VMEM),
    )(x2, ch_map, cols, scal, wmasks)
    return out.reshape(n, 1, h, w)


def init_params(key, in_ch):
    k1, k2, k3, k4, k5, k6, k7, k8 = jax.random.split(key, 8)
    return {
        "bn1_gamma": 1.0 + 0.1 * jax.random.normal(k1, (in_ch,), jnp.float32),
        "bn1_beta": 0.1 * jax.random.normal(k2, (in_ch,), jnp.float32),
        "conv1_w": 0.5 * jax.random.normal(k3, (1, in_ch, 1, 1), jnp.float32),
        "conv1_b": 0.1 * jax.random.normal(k4, (1,), jnp.float32),
        "bn2_gamma": 1.0 + 0.1 * jax.random.normal(k5, (1,), jnp.float32),
        "bn2_beta": 0.1 * jax.random.normal(k6, (1,), jnp.float32),
        "conv3_w": 0.3 * jax.random.normal(k7, (1, 1, 3, 3), jnp.float32),
        "conv3_b": 0.1 * jax.random.normal(k8, (1,), jnp.float32),
    }


def attention_reference(x, params):
    """Plain-JAX reference of the PyTorch attention.forward (training-mode BN)."""
    g1 = params["bn1_gamma"].reshape(1, -1, 1, 1)
    b1 = params["bn1_beta"].reshape(1, -1, 1, 1)
    mean = jnp.mean(x, axis=(0, 2, 3), keepdims=True)
    var = jnp.mean((x - mean) ** 2, axis=(0, 2, 3), keepdims=True)
    t = jnp.maximum((x - mean) * jax.lax.rsqrt(var + _EPS) * g1 + b1, 0.0)

    t = jax.lax.conv_general_dilated(
        t, params["conv1_w"], (1, 1), "VALID",
        dimension_numbers=("NCHW", "OIHW", "NCHW"))
    t = t + params["conv1_b"].reshape(1, -1, 1, 1)

    mean2 = jnp.mean(t)
    var2 = jnp.mean((t - mean2) ** 2)
    t = jnp.maximum((t - mean2) * jax.lax.rsqrt(var2 + _EPS) * params["bn2_gamma"]
                    + params["bn2_beta"], 0.0)

    t = jax.lax.conv_general_dilated(
        t, params["conv3_w"], (1, 1), ((1, 1), (1, 1)),
        dimension_numbers=("NCHW", "OIHW", "NCHW"))
    return t + params["conv3_b"].reshape(1, -1, 1, 1)


if __name__ == "__main__":
    key = jax.random.PRNGKey(0)
    kx, kp = jax.random.split(key)

    batch, in_ch, spatial = 2, 4, 16
    x = jax.random.normal(kx, (batch, in_ch, spatial, spatial), jnp.float32)
    params = init_params(kp, in_ch)

    out = attention_forward(x, params)
    jax.block_until_ready(out)

    assert out.shape == (batch, 1, spatial, spatial)
    ref = attention_reference(x, params)
    err = float(jnp.max(jnp.abs(out - ref)))
    assert err < 1e-3, f"max abs error vs reference: {err}"

    print("KERNEL_OK")
</pallas_src>

<mosaic_0001>
module attributes {stable_mosaic.version = 11 : i64} {
  func.func @_attention_kernel(%arg0: memref<8x256xf32, #tpu.memory_space<vmem>>, %arg1: memref<8x4xf32, #tpu.memory_space<vmem>>, %arg2: memref<8x3xf32, #tpu.memory_space<vmem>>, %arg3: memref<4xf32, #tpu.memory_space<smem>>, %arg4: memref<9x256xf32, #tpu.memory_space<vmem>>, %arg5: memref<2x256xf32, #tpu.memory_space<vmem>>) attributes {dimension_semantics = [], scalar_prefetch = 0 : i64, scratch_operands = 0 : i64, tpu.core_type = #tpu.core_type<tc>} {
    %c0 = arith.constant 0 : index
    %c0_0 = arith.constant 0 : index
    %0 = vector.load %arg0[%c0, %c0_0] : memref<8x256xf32, #tpu.memory_space<vmem>>, vector<8x256xf32>
    %c0_1 = arith.constant 0 : index
    %c0_2 = arith.constant 0 : index
    %1 = vector.load %arg1[%c0_1, %c0_2] : memref<8x4xf32, #tpu.memory_space<vmem>>, vector<8x4xf32>
    %c0_3 = arith.constant 0 : index
    %c0_4 = arith.constant 0 : index
    %2 = vector.load %arg2[%c0_3, %c0_4] : memref<8x3xf32, #tpu.memory_space<vmem>>, vector<8x3xf32>
    %3 = vector.extract_strided_slice %2 {offsets = [0, 0], sizes = [8, 1], strides = [1, 1]} : vector<8x3xf32> to vector<8x1xf32>
    %4 = vector.extract_strided_slice %2 {offsets = [0, 1], sizes = [8, 1], strides = [1, 1]} : vector<8x3xf32> to vector<8x1xf32>
    %5 = vector.extract_strided_slice %2 {offsets = [0, 2], sizes = [8, 1], strides = [1, 1]} : vector<8x3xf32> to vector<8x1xf32>
    %cst = arith.constant dense<0.000000e+00> : vector<8xf32>
    %6 = vector.multi_reduction <add>, %0, %cst [1] : vector<8x256xf32> to vector<8xf32>
    %7 = vector.shape_cast %6 : vector<8xf32> to vector<8x1xf32>
    %8 = vector.broadcast %7 : vector<8x1xf32> to vector<8x4xf32>
    %9 = arith.mulf %8, %1 : vector<8x4xf32>
    %cst_5 = arith.constant dense<0.000000e+00> : vector<4xf32>
    %10 = vector.multi_reduction <add>, %9, %cst_5 [0] : vector<8x4xf32> to vector<4xf32>
    %11 = vector.shape_cast %10 : vector<4xf32> to vector<1x4xf32>
    %cst_6 = arith.constant 0.001953125 : f32
    %12 = vector.broadcast %cst_6 : f32 to vector<1x4xf32>
    %13 = arith.mulf %11, %12 : vector<1x4xf32>
    %14 = vector.broadcast %13 : vector<1x4xf32> to vector<8x4xf32>
    %15 = arith.mulf %1, %14 : vector<8x4xf32>
    %cst_7 = arith.constant dense<0.000000e+00> : vector<8xf32>
    %16 = vector.multi_reduction <add>, %15, %cst_7 [1] : vector<8x4xf32> to vector<8xf32>
    %17 = vector.shape_cast %16 : vector<8xf32> to vector<8x1xf32>
    %18 = vector.broadcast %17 : vector<8x1xf32> to vector<8x256xf32>
    %19 = arith.subf %0, %18 : vector<8x256xf32>
    %20 = arith.mulf %19, %19 : vector<8x256xf32>
    %cst_8 = arith.constant dense<0.000000e+00> : vector<8xf32>
    %21 = vector.multi_reduction <add>, %20, %cst_8 [1] : vector<8x256xf32> to vector<8xf32>
    %22 = vector.shape_cast %21 : vector<8xf32> to vector<8x1xf32>
    %23 = vector.broadcast %22 : vector<8x1xf32> to vector<8x4xf32>
    %24 = arith.mulf %23, %1 : vector<8x4xf32>
    %cst_9 = arith.constant dense<0.000000e+00> : vector<4xf32>
    %25 = vector.multi_reduction <add>, %24, %cst_9 [0] : vector<8x4xf32> to vector<4xf32>
    %26 = vector.shape_cast %25 : vector<4xf32> to vector<1x4xf32>
    %cst_10 = arith.constant 0.001953125 : f32
    %27 = vector.broadcast %cst_10 : f32 to vector<1x4xf32>
    %28 = arith.mulf %26, %27 : vector<1x4xf32>
    %29 = vector.broadcast %28 : vector<1x4xf32> to vector<8x4xf32>
    %30 = arith.mulf %1, %29 : vector<8x4xf32>
    %cst_11 = arith.constant dense<0.000000e+00> : vector<8xf32>
    %31 = vector.multi_reduction <add>, %30, %cst_11 [1] : vector<8x4xf32> to vector<8xf32>
    %32 = vector.shape_cast %31 : vector<8xf32> to vector<8x1xf32>
    %cst_12 = arith.constant 9.99999974E-6 : f32
    %33 = vector.broadcast %cst_12 : f32 to vector<8x1xf32>
    %34 = arith.addf %32, %33 : vector<8x1xf32>
    %35 = math.rsqrt %34 : vector<8x1xf32>
    %36 = arith.mulf %35, %3 : vector<8x1xf32>
    %37 = vector.broadcast %36 : vector<8x1xf32> to vector<8x256xf32>
    %38 = arith.mulf %19, %37 : vector<8x256xf32>
    %39 = vector.broadcast %4 : vector<8x1xf32> to vector<8x256xf32>
    %40 = arith.addf %38, %39 : vector<8x256xf32>
    %cst_13 = arith.constant 0.000000e+00 : f32
    %41 = vector.broadcast %cst_13 : f32 to vector<8x256xf32>
    %42 = arith.maximumf %40, %41 : vector<8x256xf32>
    %43 = vector.broadcast %5 : vector<8x1xf32> to vector<8x256xf32>
    %44 = arith.mulf %42, %43 : vector<8x256xf32>
    %45 = vector.extract_strided_slice %44 {offsets = [0, 0], sizes = [4, 256], strides = [1, 1]} : vector<8x256xf32> to vector<4x256xf32>
    %cst_14 = arith.constant dense<0.000000e+00> : vector<256xf32>
    %46 = vector.multi_reduction <add>, %45, %cst_14 [0] : vector<4x256xf32> to vector<256xf32>
    %47 = vector.shape_cast %46 : vector<256xf32> to vector<1x256xf32>
    %48 = vector.extract_strided_slice %44 {offsets = [4, 0], sizes = [4, 256], strides = [1, 1]} : vector<8x256xf32> to vector<4x256xf32>
    %cst_15 = arith.constant dense<0.000000e+00> : vector<256xf32>
    %49 = vector.multi_reduction <add>, %48, %cst_15 [0] : vector<4x256xf32> to vector<256xf32>
    %50 = vector.shape_cast %49 : vector<256xf32> to vector<1x256xf32>
    %51 = tpu.concatenate %47, %50 in 0 : vector<1x256xf32>, vector<1x256xf32> -> vector<2x256xf32>
    %c0_16 = arith.constant 0 : index
    %52 = memref.load %arg3[%c0_16] : memref<4xf32, #tpu.memory_space<smem>>
    %53 = vector.broadcast %52 : f32 to vector<2x256xf32>
    %54 = arith.addf %51, %53 : vector<2x256xf32>
    %55 = vector.shape_cast %54 : vector<2x256xf32> to vector<1x2x256xf32>
    %cst_17 = arith.constant dense<0.000000e+00> : vector<1xf32>
    %56 = vector.multi_reduction <add>, %55, %cst_17 [1, 2] : vector<1x2x256xf32> to vector<1xf32>
    %57 = vector.shape_cast %56 : vector<1xf32> to vector<1x1x1xf32>
    %58 = vector.extract %57[0, 0, 0] : f32 from vector<1x1x1xf32>
    %cst_18 = arith.constant 0.001953125 : f32
    %59 = arith.mulf %58, %cst_18 : f32
    %60 = vector.broadcast %59 : f32 to vector<2x256xf32>
    %61 = arith.subf %54, %60 : vector<2x256xf32>
    %62 = arith.mulf %61, %61 : vector<2x256xf32>
    %63 = vector.shape_cast %62 : vector<2x256xf32> to vector<1x2x256xf32>
    %cst_19 = arith.constant dense<0.000000e+00> : vector<1xf32>
    %64 = vector.multi_reduction <add>, %63, %cst_19 [1, 2] : vector<1x2x256xf32> to vector<1xf32>
    %65 = vector.shape_cast %64 : vector<1xf32> to vector<1x1x1xf32>
    %66 = vector.extract %65[0, 0, 0] : f32 from vector<1x1x1xf32>
    %cst_20 = arith.constant 0.001953125 : f32
    %67 = arith.mulf %66, %cst_20 : f32
    %cst_21 = arith.constant 9.99999974E-6 : f32
    %68 = arith.addf %67, %cst_21 : f32
    %69 = math.rsqrt %68 : f32
    %c1 = arith.constant 1 : index
    %70 = memref.load %arg3[%c1] : memref<4xf32, #tpu.memory_space<smem>>
    %71 = arith.mulf %69, %70 : f32
    %72 = vector.broadcast %71 : f32 to vector<2x256xf32>
    %73 = arith.mulf %61, %72 : vector<2x256xf32>
    %c2 = arith.constant 2 : index
    %74 = memref.load %arg3[%c2] : memref<4xf32, #tpu.memory_space<smem>>
    %75 = vector.broadcast %74 : f32 to vector<2x256xf32>
    %76 = arith.addf %73, %75 : vector<2x256xf32>
    %cst_22 = arith.constant 0.000000e+00 : f32
    %77 = vector.broadcast %cst_22 : f32 to vector<2x256xf32>
    %78 = arith.maximumf %76, %77 : vector<2x256xf32>
    %c0_23 = arith.constant 0 : index
    %c0_24 = arith.constant 0 : index
    %79 = vector.load %arg4[%c0_23, %c0_24] : memref<9x256xf32, #tpu.memory_space<vmem>>, vector<9x256xf32>
    %c17_i32 = arith.constant 17 : i32
    %80 = tpu.dynamic_rotate %78 by %c17_i32 dim 1 : vector<2x256xf32>, i32 -> vector<2x256xf32>
    %81 = vector.extract_strided_slice %79 {offsets = [0, 0], sizes = [1, 256], strides = [1, 1]} : vector<9x256xf32> to vector<1x256xf32>
    %82 = vector.broadcast %81 : vector<1x256xf32> to vector<2x256xf32>
    %83 = arith.mulf %80, %82 : vector<2x256xf32>
    %c16_i32 = arith.constant 16 : i32
    %84 = tpu.dynamic_rotate %78 by %c16_i32 dim 1 : vector<2x256xf32>, i32 -> vector<2x256xf32>
    %85 = vector.extract_strided_slice %79 {offsets = [1, 0], sizes = [1, 256], strides = [1, 1]} : vector<9x256xf32> to vector<1x256xf32>
    %86 = vector.broadcast %85 : vector<1x256xf32> to vector<2x256xf32>
    %87 = arith.mulf %84, %86 : vector<2x256xf32>
    %c15_i32 = arith.constant 15 : i32
    %88 = tpu.dynamic_rotate %78 by %c15_i32 dim 1 : vector<2x256xf32>, i32 -> vector<2x256xf32>
    %89 = vector.extract_strided_slice %79 {offsets = [2, 0], sizes = [1, 256], strides = [1, 1]} : vector<9x256xf32> to vector<1x256xf32>
    %90 = vector.broadcast %89 : vector<1x256xf32> to vector<2x256xf32>
    %91 = arith.mulf %88, %90 : vector<2x256xf32>
    %c1_i32 = arith.constant 1 : i32
    %92 = tpu.dynamic_rotate %78 by %c1_i32 dim 1 : vector<2x256xf32>, i32 -> vector<2x256xf32>
    %93 = vector.extract_strided_slice %79 {offsets = [3, 0], sizes = [1, 256], strides = [1, 1]} : vector<9x256xf32> to vector<1x256xf32>
    %94 = vector.broadcast %93 : vector<1x256xf32> to vector<2x256xf32>
    %95 = arith.mulf %92, %94 : vector<2x256xf32>
    %96 = vector.extract_strided_slice %79 {offsets = [4, 0], sizes = [1, 256], strides = [1, 1]} : vector<9x256xf32> to vector<1x256xf32>
    %97 = vector.broadcast %96 : vector<1x256xf32> to vector<2x256xf32>
    %98 = arith.mulf %78, %97 : vector<2x256xf32>
    %c255_i32 = arith.constant 255 : i32
    %99 = tpu.dynamic_rotate %78 by %c255_i32 dim 1 : vector<2x256xf32>, i32 -> vector<2x256xf32>
    %100 = vector.extract_strided_slice %79 {offsets = [5, 0], sizes = [1, 256], strides = [1, 1]} : vector<9x256xf32> to vector<1x256xf32>
    %101 = vector.broadcast %100 : vector<1x256xf32> to vector<2x256xf32>
    %102 = arith.mulf %99, %101 : vector<2x256xf32>
    %c241_i32 = arith.constant 241 : i32
    %103 = tpu.dynamic_rotate %78 by %c241_i32 dim 1 : vector<2x256xf32>, i32 -> vector<2x256xf32>
    %104 = vector.extract_strided_slice %79 {offsets = [6, 0], sizes = [1, 256], strides = [1, 1]} : vector<9x256xf32> to vector<1x256xf32>
    %105 = vector.broadcast %104 : vector<1x256xf32> to vector<2x256xf32>
    %106 = arith.mulf %103, %105 : vector<2x256xf32>
    %c240_i32 = arith.constant 240 : i32
    %107 = tpu.dynamic_rotate %78 by %c240_i32 dim 1 : vector<2x256xf32>, i32 -> vector<2x256xf32>
    %108 = vector.extract_strided_slice %79 {offsets = [7, 0], sizes = [1, 256], strides = [1, 1]} : vector<9x256xf32> to vector<1x256xf32>
    %109 = vector.broadcast %108 : vector<1x256xf32> to vector<2x256xf32>
    %110 = arith.mulf %107, %109 : vector<2x256xf32>
    %c239_i32 = arith.constant 239 : i32
    %111 = tpu.dynamic_rotate %78 by %c239_i32 dim 1 : vector<2x256xf32>, i32 -> vector<2x256xf32>
    %112 = vector.extract_strided_slice %79 {offsets = [8, 0], sizes = [1, 256], strides = [1, 1]} : vector<9x256xf32> to vector<1x256xf32>
    %113 = vector.broadcast %112 : vector<1x256xf32> to vector<2x256xf32>
    %114 = arith.mulf %111, %113 : vector<2x256xf32>
    %115 = arith.addf %83, %87 : vector<2x256xf32>
    %116 = arith.addf %91, %95 : vector<2x256xf32>
    %117 = arith.addf %98, %102 : vector<2x256xf32>
    %118 = arith.addf %106, %110 : vector<2x256xf32>
    %119 = arith.addf %115, %116 : vector<2x256xf32>
    %120 = arith.addf %117, %118 : vector<2x256xf32>
    %121 = arith.addf %119, %120 : vector<2x256xf32>
    %122 = arith.addf %121, %114 : vector<2x256xf32>
    %c3 = arith.constant 3 : index
    %123 = memref.load %arg3[%c3] : memref<4xf32, #tpu.memory_space<smem>>
    %124 = vector.broadcast %123 : f32 to vector<2x256xf32>
    %125 = arith.addf %122, %124 : vector<2x256xf32>
    %c0_25 = arith.constant 0 : index
    %c0_26 = arith.constant 0 : index
    %126 = vector.load %arg5[%c0_25, %c0_26] : memref<2x256xf32, #tpu.memory_space<vmem>>, vector<2x256xf32>
    tpu.vector_store %arg5[%c0_25, %c0_26], %125 {strides = array<i32>} : memref<2x256xf32, #tpu.memory_space<vmem>>, vector<2x256xf32>,
    return
  }
}

</mosaic_0001>

<llo_original>
// kernel: mul.5
$region0: #{mul.5}
  %s0 = inlined_call_operand.vmem [shape: f32[3,3], index: 0, kind: input, shape index: {}]
  %s1 = inlined_call_operand.vmem [shape: f32[9], index: 1, kind: output, shape index: {}]
  $region1: #{mul.5} parent=0
    #allocation0 [shape = 'u8[4096]{0}', space=vmem, size = 0x1000, scoped, tag = 'scoped mem for output reshape']
    #allocation1 [shape = 'u8[4096]{0}', space=vmem, size = 0x1000, scoped, tag = 'scoped mem for input reshape']
    %s3 = sshllo.u32 0, 4
    %v4 = vld [vmem:[%s0] sm:%s3]
    %5 = vst [vmem:[#allocation1] sm:%s3] %v4
    %v6 = vld [vmem:[#allocation1] sm:$0x1]
    %vm7 = vcmask 23552
    %8 = vst.msk [vmem:[#allocation0] sm:$0x1] %vm7, %v6
    %s9 = scalar_lea.vmem [#allocation1], 2
    %v10 = vld [vmem:[%s9] sm:$0x1]
    %11 = vrot.lane.b32.xlu0 %v10, 6
    %v12 = vpop.permute.xlu0 %11
    %vm13 = vcmask 72752
    %14 = vst.msk [vmem:[#allocation0] sm:$0x1] %vm13, %v12
    %s15 = scalar_lea.vmem [#allocation1], 1
    %v16 = vld [vmem:[%s15] sm:$0x1]
    %17 = vrot.lane.b32.xlu0 %v16, 3
    %v18 = vpop.permute.xlu0 %17
    %vm19 = vcmask 48152
    %20 = vst.msk [vmem:[#allocation0] sm:$0x1] %vm19, %v18
    %s22 = sshllo.u32 0, 1
    %v24 = vld [vmem:[#allocation0] sm:%s22]
    %s25 = sshllo.u32 0, 1
    %26 = vst [vmem:[%s1] sm:%s25] %v24

// kernel: attention_forward.1
$region0: #{attention_forward.1}
  #allocation0 [shape = 'u32[]', space=smem, size = 0x4, offset = 0x4, fixed_abs, tag = 'smem constant byte address 0x4 - core index']
  #allocation1 [shape = 'u32[144,128]{1,0:T(1,128)}', space=vmem, size = 0x12000, scoped, tag = 'internal scratch']
  %s0 = inlined_call_operand.vmem [shape: f32[8,256], index: 0, kind: input, shape index: {}]
  %s1 = inlined_call_operand.vmem [shape: f32[8,4], index: 1, kind: input, shape index: {}]
  %s2 = inlined_call_operand.vmem [shape: f32[8,3], index: 2, kind: input, shape index: {}]
  %s3 = inlined_call_operand.vmem [shape: f32[4], index: 3, kind: input, shape index: {}]
  %s4 = inlined_call_operand.vmem [shape: f32[9,256], index: 4, kind: input, shape index: {}]
  %s5 = inlined_call_operand.vmem [shape: f32[2,256], index: 5, kind: output, shape index: {}]
  %s6 = sld [smem:[#allocation0]]
  $region34: #{attention_forward.1} parent=0
    _
  %s8 = ssub.s32 1, %s6
  %s9 = scalar_select 0, %s8, %s6
  $region1: #{attention_forward.1} parent=0
    #allocation2 [shape = 'u8[512]{0}', space=smem, size = 0x200, scoped, tag = 'input window, operand 3, single buffered']
    #allocation3 [shape = 's32[1]{0}', space=sflag, size = 0x4, scoped, tag = 'scoped memory for attention_forward.1']
    %10 = vsyncpa [#allocation3], 0
    // Predicated region
    $region2: #{attention_forward.1} parent=1 // pred_check
      _
    $region3: #{attention_forward.1} parent=1 // pred_check_branch
      %12 = sbr.rel (0) target = $region5
    $region4: #{attention_forward.1} parent=1 // pred_region
      _
    $region5: #{attention_forward.1} parent=1 // pred_fallthru
      _
    // Predicated region
    $region6: #{attention_forward.1} parent=1 // pred_check
      _
    $region7: #{attention_forward.1} parent=1 // pred_check_branch
      %14 = sbr.rel (0) target = $region9
    $region8: #{attention_forward.1} parent=1 // pred_region
      _
    $region9: #{attention_forward.1} parent=1 // pred_fallthru
      _
    // Predicated region
    $region10: #{attention_forward.1} parent=1 // pred_check
      _
    $region11: #{attention_forward.1} parent=1 // pred_check_branch
      %16 = sbr.rel (0) target = $region13
    $region12: #{attention_forward.1} parent=1 // pred_region
      _
    $region13: #{attention_forward.1} parent=1 // pred_fallthru
      _
    // Predicated region
    $region14: #{attention_forward.1} parent=1 // pred_check
      _
    $region15: #{attention_forward.1} parent=1 // pred_check_branch
      %18 = sbr.rel (0) target = $region17
    $region16: #{attention_forward.1} parent=1 // pred_region
      %s20 = ssub.s32 16, 16
      %21 = vsyncadd [#allocation3], %s20
      %s23 = sshll.u32 %s3, 4
      %s24 = int_to_ptr.vmem [resolvable:$true] %s23
      %26 = dma.vmem_to_smem %s24, 16, [#allocation2], [#allocation3]
    $region17: #{attention_forward.1} parent=1 // pred_fallthru
      _
    // Predicated region
    $region18: #{attention_forward.1} parent=1 // pred_check
      _
    $region19: #{attention_forward.1} parent=1 // pred_check_branch
      %28 = sbr.rel (0) target = $region21
    $region20: #{attention_forward.1} parent=1 // pred_region
      _
    $region21: #{attention_forward.1} parent=1 // pred_fallthru
      _
    // Predicated region
    $region22: #{attention_forward.1} parent=1 // pred_check
      _
    $region23: #{attention_forward.1} parent=1 // pred_check_branch
      %30 = sbr.rel (0) target = $region25
    $region24: #{attention_forward.1} parent=1 // pred_region
      %31 = dma.done [#allocation3], 16
    $region25: #{attention_forward.1} parent=1 // pred_fallthru
      _
    %32 = sfence
    %v33 = vld [vmem:[%s0] sm:$0xff]
    %v34 = vld [vmem:[%s0 + $0x8] sm:$0xff]
    %v35 = vld [vmem:[%s1] sm:$0xff]
    %v36 = vld [vmem:[%s2] sm:$0xff]
    %v37 = vadd.f32 %v33, %v34
    %38 = vadd.xlane.f32.xlu0 %v37
    %v39 = vpop.xlane.xlu0 %38
    %v40 = vmul.f32 %v39, %v35
    %vm41 = vcmask 31744
    %v42 = vsel %vm41, %v40, 0.0
    %v43 = vrot.slane %v42, 4
    %v44 = vadd.f32 %v42, %v43
    %v45 = vrot.slane %v44, 2
    %v46 = vadd.f32 %v44, %v45
    %v47 = vrot.slane %v46, 1
    %v48 = vadd.f32 %v46, %v47
    %v49 = vmul.f32 %v48, 0.001953125
    %v50 = vmul.f32 %v35, %v49
    %v51 = vsel %vm41, %v50, 0.0
    %52 = vadd.xlane.f32.xlu0 %v51
    %v53 = vpop.xlane.xlu0 %52
    %v54 = vsub.f32 %v33, %v53
    %v55 = vsub.f32 %v34, %v53
    %v56 = vmul.f32 %v54, %v54
    %v57 = vmul.f32 %v55, %v55
    %v58 = vadd.f32 %v56, %v57
    %59 = vadd.xlane.f32.xlu0 %v58
    %v60 = vpop.xlane.xlu0 %59
    %v61 = vmul.f32 %v60, %v35
    %v62 = vsel %vm41, %v61, 0.0
    %v63 = vrot.slane %v62, 4
    %v64 = vadd.f32 %v62, %v63
    %v65 = vrot.slane %v64, 2
    %v66 = vadd.f32 %v64, %v65
    %v67 = vrot.slane %v66, 1
    %v68 = vadd.f32 %v66, %v67
    %v69 = vmul.f32 %v68, 0.001953125
    %v70 = vmul.f32 %v35, %v69
    %v71 = vsel %vm41, %v70, 0.0
    %72 = vadd.xlane.f32.xlu0 %v71
    %v73 = vpop.xlane.xlu0 %72
    %v74 = vadd.f32 %v73, 1e-05
    %v75 = vrsqrt.pop %v74
    %v76 = vmul.f32 %v75, %v36
    %78 = vset.pattern.permute.xlu0 0
    %79 = vperm.xlu0 %78, %v76
    %v80 = vpop.permute.xlu0 %79
    %v82 = vmul.f32 %v54, %v80
    %v83 = vmul.f32 %v55, %v80
    %85 = vset.pattern.permute.xlu0 1
    %86 = vperm.xlu0 %85, %v36
    %v87 = vpop.permute.xlu0 %86
    %v89 = vadd.f32 %v82, %v87
    %v90 = vadd.f32 %v83, %v87
    %v91 = vmax.f32 %v89, 0.0
    %v92 = vmax.f32 %v90, 0.0
    %93 = vset.pattern.permute.xlu0 2
    %94 = vperm.xlu0 %93, %v36
    %v95 = vpop.permute.xlu0 %94
    %v97 = vmul.f32 %v91, %v95
    %v98 = vmul.f32 %v92, %v95
    %vm99 = vcmask 1043456
    %v100 = vsel %vm99, %v97, 0.0
    %v101 = vrot.slane %v100, 4
    %v102 = vadd.f32 %v100, %v101
    %v103 = vrot.slane %v102, 2
    %v104 = vadd.f32 %v102, %v103
    %v105 = vrot.slane %v104, 1
    %v106 = vadd.f32 %v104, %v105
    %v107 = vsel %vm99, %v98, 0.0
    %v108 = vrot.slane %v107, 4
    %v109 = vadd.f32 %v107, %v108
    %v110 = vrot.slane %v109, 2
    %v111 = vadd.f32 %v109, %v110
    %v112 = vrot.slane %v111, 1
    %v113 = vadd.f32 %v111, %v112
    %v116 = vrot.slane %v97, 4
    %v117 = vrot.slane %v98, 4
    %v120 = vsel %vm99, %v116, 0.0
    %v121 = vrot.slane %v120, 4
    %v122 = vadd.f32 %v120, %v121
    %v123 = vrot.slane %v122, 2
    %v124 = vadd.f32 %v122, %v123
    %v125 = vrot.slane %v124, 1
    %v126 = vadd.f32 %v124, %v125
    %v127 = vsel %vm99, %v117, 0.0
    %v128 = vrot.slane %v127, 4
    %v129 = vadd.f32 %v127, %v128
    %v130 = vrot.slane %v129, 2
    %v131 = vadd.f32 %v129, %v130
    %v132 = vrot.slane %v131, 1
    %v133 = vadd.f32 %v131, %v132
    %vm134 = vcmask 1040384
    %v135 = vsel %vm134, %v106, %v126
    %v136 = vsel %vm134, %v113, %v133
    %s137 = sld [smem:[#allocation2]]
    %v138 = vstv %s137
    %v139 = vadd.f32 %v135, %v138
    %v140 = vadd.f32 %v136, %v138
    %vm141 = vcmask 1041408
    %v142 = vsel %vm141, %v139, 0.0
    %v143 = vsel %vm141, %v140, 0.0
    %v144 = vadd.f32 %v142, %v143
    %145 = vadd.xlane.f32.xlu0 %v144
    %v146 = vpop.xlane.xlu0 %145
    %v147 = vrot.slane %v146, 4
    %v148 = vadd.f32 %v146, %v147
    %v149 = vrot.slane %v148, 2
    %v150 = vadd.f32 %v148, %v149
    %v151 = vrot.slane %v150, 1
    %v152 = vadd.f32 %v150, %v151
    %s153 = vtos %v152
    %s154 = smul.f32 %s153, 0.001953125
    %v155 = vstv %s154
    %v156 = vsub.f32 %v139, %v155
    %v157 = vsub.f32 %v140, %v155
    %v158 = vmul.f32 %v156, %v156
    %v159 = vmul.f32 %v157, %v157
    %v160 = vsel %vm141, %v158, 0.0
    %v161 = vsel %vm141, %v159, 0.0
    %v162 = vadd.f32 %v160, %v161
    %163 = vadd.xlane.f32.xlu0 %v162
    %v164 = vpop.xlane.xlu0 %163
    %v165 = vrot.slane %v164, 4
    %v166 = vadd.f32 %v164, %v165
    %v167 = vrot.slane %v166, 2
    %v168 = vadd.f32 %v166, %v167
    %v169 = vrot.slane %v168, 1
    %v170 = vadd.f32 %v168, %v169
    %s171 = vtos %v170
    %s172 = smul.f32 %s171, 0.001953125
    %s173 = sadd.f32 %s172, 1e-05
    %v174 = vstv %s173
    %v175 = vrsqrt.pop %v174
    %s176 = vtos %v175
    %s177 = sld [smem:[#allocation2 + $0x1]]
    %s178 = smul.f32 %s176, %s177
    %v179 = vstv %s178
    %v180 = vmul.f32 %v156, %v179
    %v181 = vmul.f32 %v157, %v179
    %s182 = sld [smem:[#allocation2 + $0x2]]
    %v183 = vstv %s182
    %v184 = vadd.f32 %v180, %v183
    %v185 = vadd.f32 %v181, %v183
    %v186 = vmax.f32 %v184, 0.0
    %v187 = vmax.f32 %v185, 0.0
    %v188 = vld [vmem:[%s4] sm:$0xff]
    %v189 = vld [vmem:[%s4 + $0x8] sm:$0xff]
    %v190 = vld [vmem:[%s4 + $0x10] sm:$0x1]
    %v191 = vld [vmem:[%s4 + $0x18] sm:$0x1]
    %192 = vrot.lane.b32.xlu0 %v186, 17
    %v193 = vpop.permute.xlu0 %192
    %194 = vrot.lane.b32.xlu0 %v187, 17
    %v195 = vpop.permute.xlu0 %194
    %v196 = vlaneseq
    %v197 = vand.u32 %v196, 127
    %vm198 = vcmp.lt.s32.totalorder %v197, 17
    %v199 = vsel %vm198, %v193, %v195
    %v200 = vsel %vm198, %v195, %v193
    %v201 = vlaneseq
    %v202 = vshrl.u32 %v201, 7
    %v203 = vsub.s32 0, %v202
    %v204 = vrot.slane %v188, %v203
    %v205 = vlaneseq
    %v206 = vshrl.u32 %v205, 7
    %v207 = vsub.s32 0, %v206
    %v208 = vrot.slane %v189, %v207
    %v209 = vmul.f32 %v200, %v204
    %v210 = vmul.f32 %v199, %v208
    %211 = vrot.lane.b32.xlu0 %v186, 16
    %v212 = vpop.permute.xlu0 %211
    %213 = vrot.lane.b32.xlu0 %v187, 16
    %v214 = vpop.permute.xlu0 %213
    %vm215 = vcmp.lt.s32.totalorder %v197, 16
    %v216 = vsel %vm215, %v212, %v214
    %v217 = vsel %vm215, %v214, %v212
    %v218 = vlaneseq
    %v219 = vshrl.u32 %v218, 7
    %v220 = vsub.s32 1, %v219
    %v221 = vrot.slane %v188, %v220
    %v222 = vlaneseq
    %v223 = vshrl.u32 %v222, 7
    %v224 = vsub.s32 1, %v223
    %v225 = vrot.slane %v189, %v224
    %v226 = vmul.f32 %v217, %v221
    %v227 = vmul.f32 %v216, %v225
    %228 = vrot.lane.b32.xlu0 %v186, 15
    %v229 = vpop.permute.xlu0 %228
    %230 = vrot.lane.b32.xlu0 %v187, 15
    %v231 = vpop.permute.xlu0 %230
    %vm232 = vcmp.lt.s32.totalorder %v197, 15
    %v233 = vsel %vm232, %v229, %v231
    %v234 = vsel %vm232, %v231, %v229
    %v235 = vlaneseq
    %v236 = vshrl.u32 %v235, 7
    %v237 = vsub.s32 2, %v236
    %v238 = vrot.slane %v188, %v237
    %v239 = vlaneseq
    %v240 = vshrl.u32 %v239, 7
    %v241 = vsub.s32 2, %v240
    %v242 = vrot.slane %v189, %v241
    %v243 = vmul.f32 %v234, %v238
    %v244 = vmul.f32 %v233, %v242
    %245 = vrot.lane.b32.xlu0 %v186, 1
    %v246 = vpop.permute.xlu0 %245
    %247 = vrot.lane.b32.xlu0 %v187, 1
    %v248 = vpop.permute.xlu0 %247
    %vm249 = vcmp.lt.s32.totalorder %v197, 1
    %v250 = vsel %vm249, %v246, %v248
    %v251 = vsel %vm249, %v248, %v246
    %v252 = vlaneseq
    %v253 = vshrl.u32 %v252, 7
    %v254 = vsub.s32 3, %v253
    %v255 = vrot.slane %v188, %v254
    %v256 = vlaneseq
    %v257 = vshrl.u32 %v256, 7
    %v258 = vsub.s32 3, %v257
    %v259 = vrot.slane %v189, %v258
    %v260 = vmul.f32 %v251, %v255
    %v261 = vmul.f32 %v250, %v259
    %v262 = vlaneseq
    %v263 = vshrl.u32 %v262, 7
    %v264 = vsub.s32 4, %v263
    %v265 = vrot.slane %v188, %v264
    %v266 = vlaneseq
    %v267 = vshrl.u32 %v266, 7
    %v268 = vsub.s32 4, %v267
    %v269 = vrot.slane %v189, %v268
    %v270 = vmul.f32 %v186, %v265
    %v271 = vmul.f32 %v187, %v269
    %272 = vrot.lane.b32.xlu0 %v186, 127
    %v273 = vpop.permute.xlu0 %272
    %274 = vrot.lane.b32.xlu0 %v187, 127
    %v275 = vpop.permute.xlu0 %274
    %vm276 = vcmp.lt.s32.totalorder %v197, 127
    %v277 = vsel %vm276, %v273, %v275
    %v278 = vsel %vm276, %v275, %v273
    %v279 = vlaneseq
    %v280 = vshrl.u32 %v279, 7
    %v281 = vsub.s32 5, %v280
    %v282 = vrot.slane %v188, %v281
    %v283 = vlaneseq
    %v284 = vshrl.u32 %v283, 7
    %v285 = vsub.s32 5, %v284
    %v286 = vrot.slane %v189, %v285
    %v287 = vmul.f32 %v277, %v282
    %v288 = vmul.f32 %v278, %v286
    %289 = vrot.lane.b32.xlu0 %v186, 113
    %v290 = vpop.permute.xlu0 %289
    %291 = vrot.lane.b32.xlu0 %v187, 113
    %v292 = vpop.permute.xlu0 %291
    %vm293 = vcmp.lt.s32.totalorder %v197, 113
    %v294 = vsel %vm293, %v290, %v292
    %v295 = vsel %vm293, %v292, %v290
    %v296 = vlaneseq
    %v297 = vshrl.u32 %v296, 7
    %v298 = vsub.s32 6, %v297
    %v299 = vrot.slane %v188, %v298
    %v300 = vlaneseq
    %v301 = vshrl.u32 %v300, 7
    %v302 = vsub.s32 6, %v301
    %v303 = vrot.slane %v189, %v302
    %v304 = vmul.f32 %v294, %v299
    %v305 = vmul.f32 %v295, %v303
    %306 = vrot.lane.b32.xlu0 %v186, 112
    %v307 = vpop.permute.xlu0 %306
    %308 = vrot.lane.b32.xlu0 %v187, 112
    %v309 = vpop.permute.xlu0 %308
    %vm310 = vcmp.lt.s32.totalorder %v197, 112
    %v311 = vsel %vm310, %v307, %v309
    %v312 = vsel %vm310, %v309, %v307
    %v313 = vlaneseq
    %v314 = vshrl.u32 %v313, 7
    %v315 = vsub.s32 7, %v314
    %v316 = vrot.slane %v188, %v315
    %v317 = vlaneseq
    %v318 = vshrl.u32 %v317, 7
    %v319 = vsub.s32 7, %v318
    %v320 = vrot.slane %v189, %v319
    %v321 = vmul.f32 %v311, %v316
    %v322 = vmul.f32 %v312, %v320
    %323 = vrot.lane.b32.xlu0 %v186, 111
    %v324 = vpop.permute.xlu0 %323
    %325 = vrot.lane.b32.xlu0 %v187, 111
    %v326 = vpop.permute.xlu0 %325
    %vm327 = vcmp.lt.s32.totalorder %v197, 111
    %v328 = vsel %vm327, %v324, %v326
    %v329 = vsel %vm327, %v326, %v324
    %v330 = vlaneseq
    %v331 = vshrl.u32 %v330, 7
    %v332 = vsub.s32 0, %v331
    %v333 = vrot.slane %v190, %v332
    %v334 = vlaneseq
    %v335 = vshrl.u32 %v334, 7
    %v336 = vsub.s32 0, %v335
    %v337 = vrot.slane %v191, %v336
    %v338 = vmul.f32 %v328, %v333
    %v339 = vmul.f32 %v329, %v337
    %v340 = vadd.f32 %v209, %v226
    %v341 = vadd.f32 %v210, %v227
    %v342 = vadd.f32 %v243, %v260
    %v343 = vadd.f32 %v244, %v261
    %v344 = vadd.f32 %v270, %v287
    %v345 = vadd.f32 %v271, %v288
    %v346 = vadd.f32 %v304, %v321
    %v347 = vadd.f32 %v305, %v322
    %v348 = vadd.f32 %v340, %v342
    %v349 = vadd.f32 %v341, %v343
    %v350 = vadd.f32 %v344, %v346
    %v351 = vadd.f32 %v345, %v347
    %v352 = vadd.f32 %v348, %v350
    %v353 = vadd.f32 %v349, %v351
    %v354 = vadd.f32 %v352, %v338
    %v355 = vadd.f32 %v353, %v339
    %s356 = sld [smem:[#allocation2 + $0x3]]
    %v357 = vstv %s356
    %v358 = vadd.f32 %v354, %v357
    %v359 = vadd.f32 %v355, %v357
    %v362 = vcombine.low %v358, %v359
    %v364 = vunpack.c.l.s4 1983009808
    %v365 = vunpack.c.0.s8 %v364
    %v366 = vlaneseq
    %v367 = vshrl.u32 %v366, 7
    %v368 = vsub.s32 %v365, %v367
    %v369 = vrot.slane %v362, %v368
    %371 = vst [vmem:[%s5] sm:$0xf] %v369
    // Predicated region
    $region26: #{attention_forward.1} parent=1 // pred_check
      _
    $region27: #{attention_forward.1} parent=1 // pred_check_branch
      %373 = sbr.rel (0) target = $region29
    $region28: #{attention_forward.1} parent=1 // pred_region
      _
    $region29: #{attention_forward.1} parent=1 // pred_fallthru
      _
    // Predicated region
    $region30: #{attention_forward.1} parent=1 // pred_check
      _
    $region31: #{attention_forward.1} parent=1 // pred_check_branch
      %375 = sbr.rel (0) target = $region33
    $region32: #{attention_forward.1} parent=1 // pred_region
      _
    $region33: #{attention_forward.1} parent=1 // pred_fallthru
      _
    %376 = vsyncpa [#allocation3], 1

</llo_original>
